<compile_context>
chip_gen: v7x
topology: tpu7x:2x2x1
jax: 0.10.0
libtpu: 0.0.40
codegen_flags: <defaults>
</compile_context>

<pallas_src>
import numpy as np
import jax
import jax.numpy as jnp
from jax.experimental import pallas as pl
from jax.experimental.pallas import tpu as pltpu


def make_positional_encoding(d_model: int, max_len: int = 1000,
                             dtype=jnp.float32) -> jnp.ndarray:
    """Deterministic pe buffer, identical math to the PyTorch __init__."""
    position = np.arange(0, max_len, dtype=np.float32)[:, None]            # (max_len, 1)
    div_term = np.exp(
        np.arange(0, d_model, 2, dtype=np.float32) * (-np.log(10000.0) / d_model)
    )                                                                       # (d_model/2,)
    pe = np.zeros((max_len, d_model), dtype=np.float32)
    pe[:, 0::2] = np.sin(position * div_term)
    pe[:, 1::2] = np.cos(position * div_term)
    return jnp.asarray(pe[None, :, :], dtype=dtype)                         # (1, max_len, d_model)


def _pos_enc_kernel(x_ref, pe_ref, o_ref):
    # x_ref: (TB, TN) lane-dense tile; pe_ref: (1, TN), broadcast over rows (VPU).
    o_ref[...] = x_ref[...] + pe_ref[...]


def _largest_divisor_multiple(total: int, unit: int, cap: int):
    """Largest multiple of `unit` that divides `total` and is <= cap, else None."""
    if total % unit != 0:
        return None
    best = None
    k = 1
    while k * unit <= min(total, cap):
        if total % (k * unit) == 0:
            best = k * unit
        k += 1
    return best


def positional_encoding_forward(x: jnp.ndarray, pe: jnp.ndarray) -> jnp.ndarray:
    """x: (B, S, D); pe: (1, max_len, D). Returns x + pe[:, :S, :]."""
    B, S, D = x.shape
    _, max_len, Dp = pe.shape
    assert D == Dp and S <= max_len

    dtype = x.dtype
    itemsize = jnp.dtype(dtype).itemsize
    N = S * D

    # Pre-cast pe once outside the hot loop (no per-element converts in-kernel).
    if pe.dtype != dtype:
        pe = pe.astype(dtype)

    # Lane-dense 2D views (free, row-major reshapes).
    x2 = x.reshape(B, N)
    pe_flat = pe.reshape(1, max_len * D)

    # Column tile: large multiple of 128 (unmasked, lane-dense stores).
    TN = _largest_divisor_multiple(N, 128, 4096)
    if TN is None:
        # S*D not a multiple of 128: single full-width tile; pre-slice pe so its
        # block equals its full array dims (BlockSpec divisibility rule).
        TN = N
        pe_in = jax.lax.slice(pe_flat, (0, 0), (1, N))
    else:
        # Fast path: window the full pe buffer via its index_map (no extra HBM array).
        pe_in = pe_flat

    # Row (batch) tile: keep each block <= ~1 MiB so double-buffered x + out + pe
    # stays well under v7x's 64 MiB VMEM (and v5e/v6e's scoped default).
    max_rows = max(8, (1 << 20) // max(1, TN * itemsize))
    TB = _largest_divisor_multiple(B, 8, max_rows)
    if TB is None:
        TB = B  # small / odd batch: take the whole batch axis in one block

    n_col = N // TN
    n_row = B // TB
    grid = (n_col, n_row)  # batch innermost -> pe block index constant, stays resident

    cost = pl.CostEstimate(
        flops=B * N,
        transcendentals=0,
        bytes_accessed=(2 * B * N + N) * itemsize,
    )

    out2 = pl.pallas_call(
        _pos_enc_kernel,
        out_shape=jax.ShapeDtypeStruct((B, N), dtype),
        grid_spec=pltpu.PrefetchScalarGridSpec(
            num_scalar_prefetch=0,
            grid=grid,
            in_specs=[
                pl.BlockSpec((TB, TN), lambda j, b: (b, j)),   # x tile
                pl.BlockSpec((1, TN), lambda j, b: (0, j)),    # pe: constant over inner (batch) axis
            ],
            out_specs=pl.BlockSpec((TB, TN), lambda j, b: (b, j)),
        ),
        compiler_params=pltpu.CompilerParams(
            dimension_semantics=("parallel", "parallel"),
        ),
        cost_estimate=cost,
    )(x2, pe_in)

    return out2.reshape(B, S, D)


if __name__ == "__main__":
    B, S, D = 2, 8, 32
    max_len = 1000

    key = jax.random.PRNGKey(0)
    x = jax.random.normal(key, (B, S, D), dtype=jnp.float32)

    pe = make_positional_encoding(D, max_len)

    out = positional_encoding_forward(x, pe)
    out = jax.block_until_ready(out)

    # Reference check (identical semantics to the torch module's forward).
    ref = x + pe[:, :S, :]
    np.testing.assert_allclose(np.asarray(out), np.asarray(ref), rtol=1e-6, atol=1e-6)

    print("KERNEL_OK")
</pallas_src>

<mosaic_0001>
module attributes {stable_mosaic.version = 11 : i64} {
  func.func @_pos_enc_kernel(%arg0: i32, %arg1: i32, %arg2: memref<2x256xf32, #tpu.memory_space<vmem>>, %arg3: memref<1x256xf32, #tpu.memory_space<vmem>>, %arg4: memref<2x256xf32, #tpu.memory_space<vmem>>) attributes {dimension_semantics = [#tpu.dimension_semantics<parallel>, #tpu.dimension_semantics<parallel>], iteration_bounds = array<i64: 1, 1>, scalar_prefetch = 0 : i64, scratch_operands = 0 : i64, tpu.core_type = #tpu.core_type<tc>, window_params = [{transform_indices = @transform_0, window_bounds = array<i64: 2, 256>}, {transform_indices = @transform_1, window_bounds = array<i64: 1, 256>}, {transform_indices = @transform_2, window_bounds = array<i64: 2, 256>}]} {
    %c0 = arith.constant 0 : index
    %c0_0 = arith.constant 0 : index
    %0 = vector.load %arg2[%c0, %c0_0] : memref<2x256xf32, #tpu.memory_space<vmem>>, vector<2x256xf32>
    %c0_1 = arith.constant 0 : index
    %c0_2 = arith.constant 0 : index
    %1 = vector.load %arg3[%c0_1, %c0_2] : memref<1x256xf32, #tpu.memory_space<vmem>>, vector<1x256xf32>
    %2 = vector.broadcast %1 : vector<1x256xf32> to vector<2x256xf32>
    %3 = arith.addf %0, %2 : vector<2x256xf32>
    %c0_3 = arith.constant 0 : index
    %c0_4 = arith.constant 0 : index
    %4 = vector.load %arg4[%c0_3, %c0_4] : memref<2x256xf32, #tpu.memory_space<vmem>>, vector<2x256xf32>
    tpu.vector_store %arg4[%c0_3, %c0_4], %3 {strides = array<i32>} : memref<2x256xf32, #tpu.memory_space<vmem>>, vector<2x256xf32>,
    return
  }
  func.func @transform_0(%arg0: i32, %arg1: i32) -> (i32, i32) {
    %c0_i32 = arith.constant 0 : i32
    return %arg1, %arg0 : i32, i32
  }
  func.func @transform_1(%arg0: i32, %arg1: i32) -> (i32, i32) {
    %c0_i32 = arith.constant 0 : i32
    %c0_i32_0 = arith.constant 0 : i32
    return %c0_i32, %arg0 : i32, i32
  }
  func.func @transform_2(%arg0: i32, %arg1: i32) -> (i32, i32) {
    %c0_i32 = arith.constant 0 : i32
    return %arg1, %arg0 : i32, i32
  }
}

</mosaic_0001>

<llo_original>
// kernel: tpu_custom_call.1
$region0: #{tpu_custom_call.1}
  #allocation0 [shape = 'u32[]', space=smem, size = 0x4, offset = 0x4, fixed_abs, tag = 'smem constant byte address 0x4 - core index']
  #allocation1 [shape = 'u32[144,128]{1,0:T(1,128)}', space=vmem, size = 0x12000, scoped, tag = 'internal scratch']
  %s0 = inlined_call_operand.hbm [shape: f32[2,256], index: 0, kind: input, shape index: {}]
  %s1 = inlined_call_operand.hbm [shape: f32[1,32000], index: 1, kind: input, shape index: {}]
  %s2 = inlined_call_operand.hbm [shape: f32[2,256], index: 2, kind: output, shape index: {}]
  %s3 = sld [smem:[#allocation0]]
  $region26: #{tpu_custom_call.1} parent=0
    _
  %s5 = ssub.s32 1, %s3
  %s6 = scalar_select 0, %s5, %s3
  $region1: #{tpu_custom_call.1} parent=0
    #allocation2 [shape = 'u8[2048]{0}', space=vmem, size = 0x800, scoped, tag = 'input window, operand 0, single buffered']
    #allocation3 [shape = 's32[1]{0}', space=sflag, size = 0x4, scoped, tag = 'scoped memory for tpu_custom_call.1']
    #allocation4 [shape = 's32[1]{0}', space=sflag, size = 0x4, scoped, tag = 'scoped memory for tpu_custom_call.1']
    #allocation5 [shape = 'u8[1024]{0}', space=vmem, size = 0x400, scoped, tag = 'input window, operand 1, single buffered']
    #allocation6 [shape = 's32[1]{0}', space=sflag, size = 0x4, scoped, tag = 'scoped memory for tpu_custom_call.1']
    #allocation7 [shape = 'u8[2048]{0}', space=vmem, size = 0x800, scoped, tag = 'output window, operand 0, single buffered']
    %7 = vsyncpa [#allocation3], 0
    %8 = vsyncpa [#allocation6], 0
    %9 = vsyncpa [#allocation4], 0
    // Predicated region
    $region2: #{tpu_custom_call.1} parent=1 // pred_check
      _
    $region3: #{tpu_custom_call.1} parent=1 // pred_check_branch
      %11 = sbr.rel (0) target = $region5
    $region4: #{tpu_custom_call.1} parent=1 // pred_region
      %s13 = ssub.s32 64, 64
      %14 = vsyncadd [#allocation3], %s13
      %s16 = sshll.u32 [#allocation2], 4
      %s17 = int_to_ptr.vmem [resolvable:$true] %s16
      %19 = dma.hbm_to_vmem [thread:$0]  %s0, 64, %s17, [#allocation3]
    $region5: #{tpu_custom_call.1} parent=1 // pred_fallthru
      _
    // Predicated region
    $region6: #{tpu_custom_call.1} parent=1 // pred_check
      _
    $region7: #{tpu_custom_call.1} parent=1 // pred_check_branch
      %21 = sbr.rel (0) target = $region9
    $region8: #{tpu_custom_call.1} parent=1 // pred_region
      %s23 = ssub.s32 32, 32
      %24 = vsyncadd [#allocation6], %s23
      %s26 = sshll.u32 [#allocation5], 4
      %s27 = int_to_ptr.vmem [resolvable:$true] %s26
      %29 = dma.hbm_to_vmem [thread:$0]  %s1, 32, %s27, [#allocation6]
    $region9: #{tpu_custom_call.1} parent=1 // pred_fallthru
      _
    // Predicated region
    $region10: #{tpu_custom_call.1} parent=1 // pred_check
      _
    $region11: #{tpu_custom_call.1} parent=1 // pred_check_branch
      %31 = sbr.rel (0) target = $region13
    $region12: #{tpu_custom_call.1} parent=1 // pred_region
      %32 = dma.done [#allocation3], 64
    $region13: #{tpu_custom_call.1} parent=1 // pred_fallthru
      _
    // Predicated region
    $region14: #{tpu_custom_call.1} parent=1 // pred_check
      _
    $region15: #{tpu_custom_call.1} parent=1 // pred_check_branch
      %34 = sbr.rel (0) target = $region17
    $region16: #{tpu_custom_call.1} parent=1 // pred_region
      %35 = dma.done [#allocation6], 32
    $region17: #{tpu_custom_call.1} parent=1 // pred_fallthru
      _
    %v36 = vld [vmem:[#allocation2] sm:$0xf]
    %v37 = vld [vmem:[#allocation5] sm:$0x3]
    %v39 = vlaneseq
    %v40 = vshrl.u32 %v39, 7
    %v41 = vsub.s32 0, %v40
    %v42 = vrot.slane %v37, %v41
    %v43 = vlaneseq
    %v44 = vshrl.u32 %v43, 7
    %v45 = vsub.s32 1, %v44
    %v46 = vrot.slane %v37, %v45
    %v47 = vcombine.low %v42, %v46
    %v49 = vunpack.c.l.s4 1983009808
    %v50 = vunpack.c.0.s8 %v49
    %v51 = vlaneseq
    %v52 = vshrl.u32 %v51, 7
    %v53 = vsub.s32 %v50, %v52
    %v54 = vrot.slane %v47, %v53
    %v56 = vadd.f32 %v36, %v54
    %57 = vst [vmem:[#allocation7] sm:$0xf] %v56
    // Predicated region
    $region18: #{tpu_custom_call.1} parent=1 // pred_check
      _
    $region19: #{tpu_custom_call.1} parent=1 // pred_check_branch
      %59 = sbr.rel (0) target = $region21
    $region20: #{tpu_custom_call.1} parent=1 // pred_region
      %s61 = ssub.s32 64, 64
      %62 = vsyncadd [#allocation4], %s61
      %s64 = sshll.u32 [#allocation7], 4
      %s65 = int_to_ptr.vmem [resolvable:$true] %s64
      %67 = dma.vmem_to_hbm [thread:$0]  %s65, 64, %s2, [#allocation4]
    $region21: #{tpu_custom_call.1} parent=1 // pred_fallthru
      _
    // Predicated region
    $region22: #{tpu_custom_call.1} parent=1 // pred_check
      _
    $region23: #{tpu_custom_call.1} parent=1 // pred_check_branch
      %69 = sbr.rel (0) target = $region25
    $region24: #{tpu_custom_call.1} parent=1 // pred_region
      %70 = dma.done [#allocation4], 64
    $region25: #{tpu_custom_call.1} parent=1 // pred_fallthru
      _
    %71 = vsyncpa [#allocation3], 1
    %72 = vsyncpa [#allocation6], 1
    %73 = vsyncpa [#allocation4], 1

</llo_original>
